<compile_context>
chip_gen: v6e
topology: v6e:2x2x1
jax: 0.10.0
libtpu: 0.0.40
codegen_flags: <defaults>
</compile_context>

<pallas_src>
import jax
import jax.numpy as jnp
from jax.experimental import pallas as pl
from jax.experimental.pallas import tpu as pltpu

STATE_DIM = 9
ACTION_DIM = 1
HIDDEN_DIM = 128
IN_DIM = STATE_DIM + ACTION_DIM          # 10
FUSED_DIM = 2 * HIDDEN_DIM               # 256 (both Q-heads side by side)

# Row layout of the small f32 parameter buffer (SMALL_ROWS, FUSED_DIM).
ROW_W1S = 0                              # rows 0:9   state part of fused W1
ROW_W1A = STATE_DIM                      # row  9     action column of fused W1
ROW_B1 = 10                              # row 10
ROW_B2 = 11                              # row 11
ROW_W3T = 12                             # rows 12:14 fused W3 stored transposed (2,256)
SMALL_ROWS = 16                          # multiple of 8 (f32 sublane tile)


def _critic_kernel(state_ref, action_ref, small_ref, w2_ref, b3_ref, q_ref):
    f32 = jnp.float32
    state = state_ref[...]                                    # (TB, 9)  f32
    action = action_ref[...]                                  # (TB, 1)  f32
    sm = small_ref[...]                                       # (16, 256) f32

    w1s = sm[ROW_W1S:ROW_W1S + STATE_DIM, :]                  # (9, 256)
    w1a = sm[ROW_W1A:ROW_W1A + 1, :]                          # (1, 256)
    b1 = sm[ROW_B1:ROW_B1 + 1, :]                             # (1, 256)
    b2 = sm[ROW_B2:ROW_B2 + 1, :]                             # (1, 256)
    w3t = sm[ROW_W3T:ROW_W3T + 2, :]                          # (2, 256)

    # Layer 1 (both heads fused): the [state|action] concat is folded in —
    # state part on the MXU, the single action column as a VPU broadcast-mul.
    h = jnp.dot(state, w1s, preferred_element_type=f32) + action * w1a + b1
    h = jnp.maximum(h, 0.0)

    # Layer 2: block-diagonal fused (256,256) — one native-bf16 MXU pass.
    h = jnp.dot(h.astype(jnp.bfloat16), w2_ref[...],
                preferred_element_type=f32) + b2
    h = jnp.maximum(h, 0.0)

    # Layer 3: fused (256 -> 2) head; RHS stored transposed (contract lane dims).
    q = jax.lax.dot_general(h, w3t,
                            dimension_numbers=(((1,), (1,)), ((), ())),
                            preferred_element_type=f32)
    q_ref[...] = q + b3_ref[...]                              # (TB, 2)


def pack_params(raw):
    """Fuse the two heads and pack all 12 tensors (done once, outside the kernel)."""
    w1a_, b1a, w2a, b2a, w3a, b3a = raw["q1"]
    w1b_, b1b, w2b, b2b, w3b, b3b = raw["q2"]
    f32 = jnp.float32

    w1 = jnp.concatenate([w1a_, w1b_], axis=1)                       # (10, 256)
    b1 = jnp.concatenate([b1a, b1b], axis=1)                         # (1, 256)
    z_h = jnp.zeros((HIDDEN_DIM, HIDDEN_DIM), f32)
    w2 = jnp.block([[w2a, z_h], [z_h, w2b]])                         # (256, 256)
    b2 = jnp.concatenate([b2a, b2b], axis=1)                         # (1, 256)
    z_r = jnp.zeros((1, HIDDEN_DIM), f32)
    w3t = jnp.concatenate([jnp.concatenate([w3a.T, z_r], axis=1),
                           jnp.concatenate([z_r, w3b.T], axis=1)], axis=0)  # (2, 256)
    b3 = jnp.concatenate([b3a, b3b], axis=1)                         # (1, 2)

    small = jnp.concatenate([
        w1,                                                          # rows 0:10
        b1, b2,                                                      # rows 10:12
        w3t,                                                         # rows 12:14
        jnp.zeros((SMALL_ROWS - 14, FUSED_DIM), f32),                # rows 14:16
    ], axis=0).astype(f32)
    assert small.shape == (SMALL_ROWS, FUSED_DIM)

    return {
        "small": small,                                              # (16, 256) f32
        "w2": w2.astype(jnp.bfloat16),                               # (256, 256) bf16
        "b3": b3.astype(f32),                                        # (1, 2) f32
    }


def init_params(key):
    """PyTorch nn.Linear-style init; weights pre-transposed to (in, out)."""
    def lin(k, fan_in, fan_out):
        kw, kb = jax.random.split(k)
        bound = 1.0 / float(fan_in) ** 0.5
        w = jax.random.uniform(kw, (fan_in, fan_out), jnp.float32, -bound, bound)
        b = jax.random.uniform(kb, (1, fan_out), jnp.float32, -bound, bound)
        return w, b

    def head(k):
        k1, k2, k3 = jax.random.split(k, 3)
        w1, b1 = lin(k1, IN_DIM, HIDDEN_DIM)
        w2, b2 = lin(k2, HIDDEN_DIM, HIDDEN_DIM)
        w3, b3 = lin(k3, HIDDEN_DIM, 1)
        return (w1, b1, w2, b2, w3, b3)

    ka, kb = jax.random.split(key)
    raw = {"q1": head(ka), "q2": head(kb)}
    return raw, pack_params(raw)


def _round_up(x, m):
    return ((x + m - 1) // m) * m


def critic_forward(state, action, packed):
    """state: (B, 9), action: (B, 1) -> (q1, q2), each (B, 1) f32."""
    B = state.shape[0]
    state = state.astype(jnp.float32)
    action = action.astype(jnp.float32)

    # Batch tiling: one program for small B; a parallel 1-D grid for large B
    # (shards across v7x's two TensorCores).  512-row tiles are far under the
    # 64 MiB v7x VMEM budget even with double-buffering.
    TB = min(_round_up(max(B, 1), 8), 512)
    B_pad = _round_up(B, TB)
    if B_pad != B:
        state = jnp.pad(state, ((0, B_pad - B), (0, 0)))
        action = jnp.pad(action, ((0, B_pad - B), (0, 0)))
    grid = (B_pad // TB,)

    small, w2, b3 = packed["small"], packed["w2"], packed["b3"]
    flops = 2 * B_pad * (STATE_DIM * FUSED_DIM
                         + FUSED_DIM * FUSED_DIM
                         + FUSED_DIM * 2)
    bytes_accessed = (small.size * 4 + w2.size * 2 + b3.size * 4
                      + (state.size + action.size + B_pad * 2) * 4)

    q = pl.pallas_call(
        _critic_kernel,
        out_shape=jax.ShapeDtypeStruct((B_pad, 2), jnp.float32),
        grid=grid,
        in_specs=[
            pl.BlockSpec((TB, STATE_DIM), lambda i: (i, 0)),
            pl.BlockSpec((TB, ACTION_DIM), lambda i: (i, 0)),
            pl.BlockSpec((SMALL_ROWS, FUSED_DIM), lambda i: (0, 0)),  # resident
            pl.BlockSpec((FUSED_DIM, FUSED_DIM), lambda i: (0, 0)),   # resident
            pl.BlockSpec((1, 2), lambda i: (0, 0)),                   # resident
        ],
        out_specs=pl.BlockSpec((TB, 2), lambda i: (i, 0)),
        compiler_params=pltpu.CompilerParams(
            dimension_semantics=("parallel",)),
        cost_estimate=pl.CostEstimate(
            flops=flops, transcendentals=0, bytes_accessed=bytes_accessed),
    )(state, action, small, w2, b3)

    return q[:B, 0:1], q[:B, 1:2]


def reference_packed(state, action, packed):
    """Plain-XLA replica of the exact fused/bf16 kernel math."""
    f32 = jnp.float32
    state = state.astype(f32)
    action = action.astype(f32)
    sm = packed["small"]
    w1s = sm[ROW_W1S:ROW_W1S + STATE_DIM]
    w1a = sm[ROW_W1A:ROW_W1A + 1]
    b1 = sm[ROW_B1:ROW_B1 + 1]
    b2 = sm[ROW_B2:ROW_B2 + 1]
    w3t = sm[ROW_W3T:ROW_W3T + 2]

    h = jnp.dot(state, w1s, preferred_element_type=f32) + action * w1a + b1
    h = jnp.maximum(h, 0.0)
    h = jnp.dot(h.astype(jnp.bfloat16), packed["w2"],
                preferred_element_type=f32) + b2
    h = jnp.maximum(h, 0.0)
    q = jax.lax.dot_general(h, w3t, (((1,), (1,)), ((), ())),
                            preferred_element_type=f32) + packed["b3"]
    return q[:, 0:1], q[:, 1:2]


def reference_spec(state, action, raw):
    """Original PyTorch Critic semantics: two independent f32 MLPs on cat([s, a])."""
    sa = jnp.concatenate([state, action], axis=-1).astype(jnp.float32)

    def mlp(p):
        w1, b1, w2, b2, w3, b3 = p
        h = jnp.maximum(sa @ w1 + b1, 0.0)
        h = jnp.maximum(h @ w2 + b2, 0.0)
        return h @ w3 + b3

    return mlp(raw["q1"]), mlp(raw["q2"])


if __name__ == "__main__":
    key = jax.random.PRNGKey(0)
    kp, ks, ka = jax.random.split(key, 3)

    B = 8
    raw, packed = init_params(kp)
    state = jax.random.normal(ks, (B, STATE_DIM), jnp.float32)
    action = jax.random.normal(ka, (B, ACTION_DIM), jnp.float32)

    q1, q2 = critic_forward(state, action, packed)
    jax.block_until_ready((q1, q2))
    assert q1.shape == (B, 1) and q2.shape == (B, 1)

    # Check 1: kernel vs XLA replica of the same fused math (tight).
    p1, p2 = reference_packed(state, action, packed)
    assert jnp.allclose(q1, p1, atol=1e-2, rtol=1e-2)
    assert jnp.allclose(q2, p2, atol=1e-2, rtol=1e-2)

    # Check 2: kernel vs the original f32 two-head spec (bf16 W2 rounding only).
    r1, r2 = reference_spec(state, action, raw)
    assert jnp.allclose(q1, r1, atol=5e-2, rtol=5e-2)
    assert jnp.allclose(q2, r2, atol=5e-2, rtol=5e-2)

    print("KERNEL_OK")
</pallas_src>

<mosaic_0001>
module attributes {stable_mosaic.version = 11 : i64} {
  func.func @_critic_kernel(%arg0: i32, %arg1: memref<8x9xf32, #tpu.memory_space<vmem>>, %arg2: memref<8x1xf32, #tpu.memory_space<vmem>>, %arg3: memref<16x256xf32, #tpu.memory_space<vmem>>, %arg4: memref<256x256xbf16, #tpu.memory_space<vmem>>, %arg5: memref<1x2xf32, #tpu.memory_space<vmem>>, %arg6: memref<8x2xf32, #tpu.memory_space<vmem>>) attributes {dimension_semantics = [#tpu.dimension_semantics<parallel>], iteration_bounds = array<i64: 1>, scalar_prefetch = 0 : i64, scratch_operands = 0 : i64, tpu.core_type = #tpu.core_type<tc>, window_params = [{transform_indices = @transform_0, window_bounds = array<i64: 8, 9>}, {transform_indices = @transform_1, window_bounds = array<i64: 8, 1>}, {pipeline_mode = #tpu.pipeline_mode<synchronous>, transform_indices = @transform_2, window_bounds = array<i64: 16, 256>}, {pipeline_mode = #tpu.pipeline_mode<synchronous>, transform_indices = @transform_3, window_bounds = array<i64: 256, 256>}, {pipeline_mode = #tpu.pipeline_mode<synchronous>, transform_indices = @transform_4, window_bounds = array<i64: 1, 2>}, {transform_indices = @transform_5, window_bounds = array<i64: 8, 2>}]} {
    %c0 = arith.constant 0 : index
    %c0_0 = arith.constant 0 : index
    %0 = vector.load %arg1[%c0, %c0_0] : memref<8x9xf32, #tpu.memory_space<vmem>>, vector<8x9xf32>
    %c0_1 = arith.constant 0 : index
    %c0_2 = arith.constant 0 : index
    %1 = vector.load %arg2[%c0_1, %c0_2] : memref<8x1xf32, #tpu.memory_space<vmem>>, vector<8x1xf32>
    %c0_3 = arith.constant 0 : index
    %c0_4 = arith.constant 0 : index
    %2 = vector.load %arg3[%c0_3, %c0_4] : memref<16x256xf32, #tpu.memory_space<vmem>>, vector<16x256xf32>
    %3 = vector.extract_strided_slice %2 {offsets = [0, 0], sizes = [9, 256], strides = [1, 1]} : vector<16x256xf32> to vector<9x256xf32>
    %4 = vector.extract_strided_slice %2 {offsets = [9, 0], sizes = [1, 256], strides = [1, 1]} : vector<16x256xf32> to vector<1x256xf32>
    %5 = vector.extract_strided_slice %2 {offsets = [10, 0], sizes = [1, 256], strides = [1, 1]} : vector<16x256xf32> to vector<1x256xf32>
    %6 = vector.extract_strided_slice %2 {offsets = [11, 0], sizes = [1, 256], strides = [1, 1]} : vector<16x256xf32> to vector<1x256xf32>
    %7 = vector.extract_strided_slice %2 {offsets = [12, 0], sizes = [2, 256], strides = [1, 1]} : vector<16x256xf32> to vector<2x256xf32>
    %cst = arith.constant dense<0.000000e+00> : vector<8x256xf32>
    %8 = tpu.matmul %0, %3, %cst {dimension_numbers = #tpu.dot_dimension_numbers<[1], [0], [0], [1], [0, 0, 1, 1], [], []>} : vector<8x9xf32>, vector<9x256xf32>, vector<8x256xf32> -> vector<8x256xf32>
    %9 = vector.broadcast %1 : vector<8x1xf32> to vector<8x256xf32>
    %10 = vector.broadcast %4 : vector<1x256xf32> to vector<8x256xf32>
    %11 = arith.mulf %9, %10 : vector<8x256xf32>
    %12 = arith.addf %8, %11 : vector<8x256xf32>
    %13 = vector.broadcast %5 : vector<1x256xf32> to vector<8x256xf32>
    %14 = arith.addf %12, %13 : vector<8x256xf32>
    %cst_5 = arith.constant 0.000000e+00 : f32
    %15 = vector.broadcast %cst_5 : f32 to vector<8x256xf32>
    %16 = arith.maximumf %14, %15 : vector<8x256xf32>
    %17 = arith.truncf %16 : vector<8x256xf32> to vector<8x256xbf16>
    %c0_6 = arith.constant 0 : index
    %c0_7 = arith.constant 0 : index
    %18 = vector.load %arg4[%c0_6, %c0_7] : memref<256x256xbf16, #tpu.memory_space<vmem>>, vector<256x256xbf16>
    %cst_8 = arith.constant dense<0.000000e+00> : vector<8x256xf32>
    %19 = tpu.matmul %17, %18, %cst_8 {dimension_numbers = #tpu.dot_dimension_numbers<[1], [0], [0], [1], [0, 0, 1, 1], [], []>} : vector<8x256xbf16>, vector<256x256xbf16>, vector<8x256xf32> -> vector<8x256xf32>
    %20 = vector.broadcast %6 : vector<1x256xf32> to vector<8x256xf32>
    %21 = arith.addf %19, %20 : vector<8x256xf32>
    %cst_9 = arith.constant 0.000000e+00 : f32
    %22 = vector.broadcast %cst_9 : f32 to vector<8x256xf32>
    %23 = arith.maximumf %21, %22 : vector<8x256xf32>
    %cst_10 = arith.constant dense<0.000000e+00> : vector<8x2xf32>
    %24 = tpu.matmul %23, %7, %cst_10 {dimension_numbers = #tpu.dot_dimension_numbers<[1], [1], [0], [0], [0, 0, 1, 0], [], []>} : vector<8x256xf32>, vector<2x256xf32>, vector<8x2xf32> -> vector<8x2xf32>
    %c0_11 = arith.constant 0 : index
    %c0_12 = arith.constant 0 : index
    %25 = vector.load %arg5[%c0_11, %c0_12] : memref<1x2xf32, #tpu.memory_space<vmem>>, vector<1x2xf32>
    %26 = vector.broadcast %25 : vector<1x2xf32> to vector<8x2xf32>
    %27 = arith.addf %24, %26 : vector<8x2xf32>
    %c0_13 = arith.constant 0 : index
    %c0_14 = arith.constant 0 : index
    %28 = vector.load %arg6[%c0_13, %c0_14] : memref<8x2xf32, #tpu.memory_space<vmem>>, vector<8x2xf32>
    tpu.vector_store %arg6[%c0_13, %c0_14], %27 {strides = array<i32>} : memref<8x2xf32, #tpu.memory_space<vmem>>, vector<8x2xf32>,
    return
  }
  func.func @transform_0(%arg0: i32) -> (i32, i32) {
    %c0_i32 = arith.constant 0 : i32
    %c0_i32_0 = arith.constant 0 : i32
    return %arg0, %c0_i32 : i32, i32
  }
  func.func @transform_1(%arg0: i32) -> (i32, i32) {
    %c0_i32 = arith.constant 0 : i32
    %c0_i32_0 = arith.constant 0 : i32
    return %arg0, %c0_i32 : i32, i32
  }
  func.func @transform_2(%arg0: i32) -> (i32, i32) {
    %c0_i32 = arith.constant 0 : i32
    %c0_i32_0 = arith.constant 0 : i32
    %c0_i32_1 = arith.constant 0 : i32
    return %c0_i32, %c0_i32_0 : i32, i32
  }
  func.func @transform_3(%arg0: i32) -> (i32, i32) {
    %c0_i32 = arith.constant 0 : i32
    %c0_i32_0 = arith.constant 0 : i32
    %c0_i32_1 = arith.constant 0 : i32
    return %c0_i32, %c0_i32_0 : i32, i32
  }
  func.func @transform_4(%arg0: i32) -> (i32, i32) {
    %c0_i32 = arith.constant 0 : i32
    %c0_i32_0 = arith.constant 0 : i32
    %c0_i32_1 = arith.constant 0 : i32
    return %c0_i32, %c0_i32_0 : i32, i32
  }
  func.func @transform_5(%arg0: i32) -> (i32, i32) {
    %c0_i32 = arith.constant 0 : i32
    %c0_i32_0 = arith.constant 0 : i32
    return %arg0, %c0_i32 : i32, i32
  }
}

</mosaic_0001>

<llo_original>
// kernel: tpu_custom_call.1
$region0: #{tpu_custom_call.1}
  #allocation0 [shape = 'u32[]', space=smem, size = 0x4, offset = 0x4, fixed_abs, tag = 'smem constant byte address 0x4 - core index']
  #allocation1 [shape = 'u32[144,128]{1,0:T(1,128)}', space=vmem, size = 0x12000, scoped, tag = 'internal scratch']
  %s0 = inlined_call_operand.vmem [shape: f32[8,9], index: 0, kind: input, shape index: {}]
  %s1 = inlined_call_operand.vmem [shape: f32[8,1], index: 1, kind: input, shape index: {}]
  %s2 = inlined_call_operand.hbm [shape: f32[16,256], index: 2, kind: input, shape index: {}]
  %s3 = inlined_call_operand.hbm [shape: bf16[256,256], index: 3, kind: input, shape index: {}]
  %s4 = inlined_call_operand.vmem [shape: f32[1,2], index: 4, kind: input, shape index: {}]
  %s5 = inlined_call_operand.vmem [shape: f32[8,2], index: 5, kind: output, shape index: {}]
  %s6 = sld [smem:[#allocation0]]
  $region38: #{tpu_custom_call.1} parent=0
    _
  %s8 = ssub.s32 1, %s6
  %s9 = scalar_select 0, %s8, %s6
  $region1: #{tpu_custom_call.1} parent=0
    #allocation2 [shape = 'u8[16384]{0}', space=vmem, size = 0x4000, scoped, tag = 'input window, operand 2, single buffered']
    #allocation3 [shape = 's32[1]{0}', space=sflag, size = 0x4, scoped, tag = 'scoped memory for tpu_custom_call.1']
    #allocation4 [shape = 'u8[131072]{0}', space=vmem, size = 0x20000, scoped, tag = 'input window, operand 3, single buffered']
    #allocation5 [shape = 's32[1]{0}', space=sflag, size = 0x4, scoped, tag = 'scoped memory for tpu_custom_call.1']
    %10 = vsyncpa [#allocation3], 0
    %11 = vsyncpa [#allocation5], 0
    // Predicated region
    $region2: #{tpu_custom_call.1} parent=1 // pred_check
      _
    $region3: #{tpu_custom_call.1} parent=1 // pred_check_branch
      %13 = sbr.rel (0) target = $region5
    $region4: #{tpu_custom_call.1} parent=1 // pred_region
      _
    $region5: #{tpu_custom_call.1} parent=1 // pred_fallthru
      _
    // Predicated region
    $region6: #{tpu_custom_call.1} parent=1 // pred_check
      _
    $region7: #{tpu_custom_call.1} parent=1 // pred_check_branch
      %15 = sbr.rel (0) target = $region9
    $region8: #{tpu_custom_call.1} parent=1 // pred_region
      _
    $region9: #{tpu_custom_call.1} parent=1 // pred_fallthru
      _
    // Predicated region
    $region10: #{tpu_custom_call.1} parent=1 // pred_check
      _
    $region11: #{tpu_custom_call.1} parent=1 // pred_check_branch
      %17 = sbr.rel (0) target = $region13
    $region12: #{tpu_custom_call.1} parent=1 // pred_region
      %s19 = ssub.s32 512, 512
      %20 = vsyncadd [#allocation3], %s19
      %s21 = sshll.u32 [#allocation2], 4
      %s22 = int_to_ptr.vmem [resolvable:$true] %s21
      %27 = dma.hbm_to_vmem [thread:$0]  %s2, 512, %s22, [#allocation3], 256, 256, 16
    $region13: #{tpu_custom_call.1} parent=1 // pred_fallthru
      _
    // Predicated region
    $region14: #{tpu_custom_call.1} parent=1 // pred_check
      _
    $region15: #{tpu_custom_call.1} parent=1 // pred_check_branch
      %29 = sbr.rel (0) target = $region17
    $region16: #{tpu_custom_call.1} parent=1 // pred_region
      %s31 = ssub.s32 4096, 4096
      %32 = vsyncadd [#allocation5], %s31
      %s33 = sshll.u32 [#allocation4], 4
      %s34 = int_to_ptr.vmem [resolvable:$true] %s33
      %39 = dma.hbm_to_vmem [thread:$0]  %s3, 4096, %s34, [#allocation5], 128, 128, 8
    $region17: #{tpu_custom_call.1} parent=1 // pred_fallthru
      _
    // Predicated region
    $region18: #{tpu_custom_call.1} parent=1 // pred_check
      _
    $region19: #{tpu_custom_call.1} parent=1 // pred_check_branch
      %41 = sbr.rel (0) target = $region21
    $region20: #{tpu_custom_call.1} parent=1 // pred_region
      _
    $region21: #{tpu_custom_call.1} parent=1 // pred_fallthru
      _
    // Predicated region
    $region22: #{tpu_custom_call.1} parent=1 // pred_check
      _
    $region23: #{tpu_custom_call.1} parent=1 // pred_check_branch
      %43 = sbr.rel (0) target = $region25
    $region24: #{tpu_custom_call.1} parent=1 // pred_region
      %44 = dma.done [#allocation3], 512
    $region25: #{tpu_custom_call.1} parent=1 // pred_fallthru
      _
    // Predicated region
    $region26: #{tpu_custom_call.1} parent=1 // pred_check
      _
    $region27: #{tpu_custom_call.1} parent=1 // pred_check_branch
      %46 = sbr.rel (0) target = $region29
    $region28: #{tpu_custom_call.1} parent=1 // pred_region
      %47 = dma.done [#allocation5], 4096
    $region29: #{tpu_custom_call.1} parent=1 // pred_fallthru
      _
    %v48 = vld [vmem:[%s0] sm:$0xff]
    %v49 = vld [vmem:[%s1] sm:$0xff]
    %v50 = vld [vmem:[#allocation2] sm:$0xff]
    %v51 = vld [vmem:[#allocation2 + $0x8] sm:$0xff]
    %v52 = vld [vmem:[#allocation2 + $0x10] sm:$0xff]
    %v53 = vld [vmem:[#allocation2 + $0x18] sm:$0xff]
    %55 = vset.pattern.permute.xlu0 0
    %56 = vperm.xlu0 %55, %v49
    %v57 = vpop.permute.xlu0 %56
    %v59 = vlaneseq
    %v60 = vshrl.u32 %v59, 7
    %v61 = vsub.s32 1, %v60
    %v62 = vrot.slane %v52, %v61
    %v63 = vlaneseq
    %v64 = vshrl.u32 %v63, 7
    %v65 = vsub.s32 1, %v64
    %v66 = vrot.slane %v53, %v65
    %v67 = vmul.f32 %v57, %v62
    %v68 = vmul.f32 %v57, %v66
    %vm69 = vcmask 72704
    %v71 = vsel %vm69, %v48, 0
    %vm73 = vcmask 1040384
    %v75 = vsel %vm73, %v52, 0
    %v78 = vsel %vm73, %v53, 0
    %80 = vmatprep.subr.mxu0 0.0
    %81 = vmatpush1.msra.mxu0 0.0
    %82 = vmatprep.subr.mxu0 0.0
    %83 = vmatpush1.msra.mxu0 0.0
    %84 = vmatprep.subr.mxu0 0.0
    %85 = vmatpush1.msra.mxu0 0.0
    %86 = vmatprep.subr.mxu0 0.0
    %87 = vmatpush1.msra.mxu0 0.0
    %88 = vmatprep.subr.mxu0 0.0
    %89 = vmatpush1.msra.mxu0 0.0
    %90 = vmatprep.subr.mxu0 0.0
    %91 = vmatpush1.msra.mxu0 0.0
    %92 = vmatprep.subr.mxu0 0.0
    %93 = vmatpush1.msra.mxu0 0.0
    %94 = vmatprep.subr.mxu0 0.0
    %95 = vmatpush1.msra.mxu0 0.0
    %96 = vmatprep.subr.mxu0 0.0
    %97 = vmatpush1.msra.mxu0 0.0
    %98 = vmatprep.subr.mxu0 0.0
    %99 = vmatpush1.msra.mxu0 0.0
    %100 = vmatprep.subr.mxu0 0.0
    %101 = vmatpush1.msra.mxu0 0.0
    %102 = vmatprep.subr.mxu0 0.0
    %103 = vmatpush1.msra.mxu0 0.0
    %104 = vmatprep.subr.mxu0 0.0
    %105 = vmatpush1.msra.mxu0 0.0
    %106 = vmatprep.subr.mxu0 0.0
    %107 = vmatpush1.msra.mxu0 0.0
    %108 = vmatprep.subr.mxu0 %v78
    %109 = vmatpush1.msra.mxu0 %v75
    %110 = vmatprep.subr.mxu0 %v51
    %111 = vmatpush1.msra.mxu0 %v50
    %112 = vmatprep.subr.mxu0 0.0
    %113 = vmatpush2.msra.mxu0 0.0
    %114 = vmatprep.subr.mxu0 0.0
    %115 = vmatpush2.msra.mxu0 0.0
    %116 = vmatprep.subr.mxu0 0.0
    %117 = vmatpush2.msra.mxu0 0.0
    %118 = vmatprep.subr.mxu0 0.0
    %119 = vmatpush2.msra.mxu0 0.0
    %120 = vmatprep.subr.mxu0 0.0
    %121 = vmatpush2.msra.mxu0 0.0
    %122 = vmatprep.subr.mxu0 0.0
    %123 = vmatpush2.msra.mxu0 0.0
    %124 = vmatprep.subr.mxu0 0.0
    %125 = vmatpush2.msra.mxu0 0.0
    %126 = vmatprep.subr.mxu0 0.0
    %127 = vmatpush2.msra.mxu0 0.0
    %128 = vmatprep.subr.mxu0 0.0
    %129 = vmatpush2.msra.mxu0 0.0
    %130 = vmatprep.subr.mxu0 0.0
    %131 = vmatpush2.msra.mxu0 0.0
    %132 = vmatprep.subr.mxu0 0.0
    %133 = vmatpush2.msra.mxu0 0.0
    %134 = vmatprep.subr.mxu0 0.0
    %135 = vmatpush2.msra.mxu0 0.0
    %136 = vmatprep.subr.mxu0 0.0
    %137 = vmatpush2.msra.mxu0 0.0
    %138 = vmatprep.subr.mxu0 0.0
    %139 = vmatpush2.msra.mxu0 0.0
    %140 = vmatprep.subr.mxu0 0.0
    %141 = vmatpush2.msra.mxu0 0.0
    %142 = vmatprep.subr.mxu0 0.0
    %143 = vmatpush2.msra.mxu0 0.0
    %144 = vmatprep.mubr.f32.mxu0 0.0
    %145 = vmatmul.mubr.f32.gmra.mxu0 %v71
    %v146 = vpop.f32.mrf.mxu0
    %v147 = vadd.f32 %v67, %v146
    %v148 = vpop.f32.mrf.mxu0
    %v149 = vadd.f32 %v68, %v148
    %150 = vdwg.mxu0
    %v151 = vlaneseq
    %v152 = vshrl.u32 %v151, 7
    %v153 = vsub.s32 2, %v152
    %v154 = vrot.slane %v52, %v153
    %v155 = vlaneseq
    %v156 = vshrl.u32 %v155, 7
    %v157 = vsub.s32 2, %v156
    %v158 = vrot.slane %v53, %v157
    %v159 = vadd.f32 %v147, %v154
    %v160 = vadd.f32 %v149, %v158
    %v161 = vmax.f32 %v159, 0.0
    %v162 = vmax.f32 %v160, 0.0
    %v163 = vpack.c.bf16 %v161, %v161
    %v164 = vpack.c.bf16 %v162, %v162
    %v165 = vld [vmem:[#allocation4] sm:$0xff]
    %v166 = vld [vmem:[#allocation4 + $0x8] sm:$0xff]
    %v167 = vld [vmem:[#allocation4 + $0x10] sm:$0xff]
    %v168 = vld [vmem:[#allocation4 + $0x18] sm:$0xff]
    %v169 = vld [vmem:[#allocation4 + $0x20] sm:$0xff]
    %v170 = vld [vmem:[#allocation4 + $0x28] sm:$0xff]
    %v171 = vld [vmem:[#allocation4 + $0x30] sm:$0xff]
    %v172 = vld [vmem:[#allocation4 + $0x38] sm:$0xff]
    %v173 = vld [vmem:[#allocation4 + $0x40] sm:$0xff]
    %v174 = vld [vmem:[#allocation4 + $0x48] sm:$0xff]
    %v175 = vld [vmem:[#allocation4 + $0x50] sm:$0xff]
    %v176 = vld [vmem:[#allocation4 + $0x58] sm:$0xff]
    %v177 = vld [vmem:[#allocation4 + $0x60] sm:$0xff]
    %v178 = vld [vmem:[#allocation4 + $0x68] sm:$0xff]
    %v179 = vld [vmem:[#allocation4 + $0x70] sm:$0xff]
    %v180 = vld [vmem:[#allocation4 + $0x78] sm:$0xff]
    %v181 = vld [vmem:[#allocation4 + $0x80] sm:$0xff]
    %v182 = vld [vmem:[#allocation4 + $0x88] sm:$0xff]
    %v183 = vld [vmem:[#allocation4 + $0x90] sm:$0xff]
    %v184 = vld [vmem:[#allocation4 + $0x98] sm:$0xff]
    %v185 = vld [vmem:[#allocation4 + $0xa0] sm:$0xff]
    %v186 = vld [vmem:[#allocation4 + $0xa8] sm:$0xff]
    %v187 = vld [vmem:[#allocation4 + $0xb0] sm:$0xff]
    %v188 = vld [vmem:[#allocation4 + $0xb8] sm:$0xff]
    %v189 = vld [vmem:[#allocation4 + $0xc0] sm:$0xff]
    %v190 = vld [vmem:[#allocation4 + $0xc8] sm:$0xff]
    %v191 = vld [vmem:[#allocation4 + $0xd0] sm:$0xff]
    %v192 = vld [vmem:[#allocation4 + $0xd8] sm:$0xff]
    %v193 = vld [vmem:[#allocation4 + $0xe0] sm:$0xff]
    %v194 = vld [vmem:[#allocation4 + $0xe8] sm:$0xff]
    %v195 = vld [vmem:[#allocation4 + $0xf0] sm:$0xff]
    %v196 = vld [vmem:[#allocation4 + $0xf8] sm:$0xff]
    %v197 = vlaneseq
    %v198 = vshrl.u32 %v197, 7
    %v199 = vsub.s32 3, %v198
    %v200 = vrot.slane %v52, %v199
    %v201 = vlaneseq
    %v202 = vshrl.u32 %v201, 7
    %v203 = vsub.s32 3, %v202
    %v204 = vrot.slane %v53, %v203
    %v237 = vunpack.c.l.b16 %v165
    %v238 = vunpack.c.h.b16 %v165
    %v239 = vunpack.c.l.b16 %v166
    %v240 = vunpack.c.h.b16 %v166
    %v241 = vunpack.c.l.b16 %v167
    %v242 = vunpack.c.h.b16 %v167
    %v243 = vunpack.c.l.b16 %v168
    %v244 = vunpack.c.h.b16 %v168
    %v245 = vunpack.c.l.b16 %v169
    %v246 = vunpack.c.h.b16 %v169
    %v247 = vunpack.c.l.b16 %v170
    %v248 = vunpack.c.h.b16 %v170
    %v249 = vunpack.c.l.b16 %v171
    %v250 = vunpack.c.h.b16 %v171
    %v251 = vunpack.c.l.b16 %v172
    %v252 = vunpack.c.h.b16 %v172
    %v253 = vunpack.c.l.b16 %v173
    %v254 = vunpack.c.h.b16 %v173
    %v255 = vunpack.c.l.b16 %v174
    %v256 = vunpack.c.h.b16 %v174
    %v257 = vunpack.c.l.b16 %v175
    %v258 = vunpack.c.h.b16 %v175
    %v259 = vunpack.c.l.b16 %v176
    %v260 = vunpack.c.h.b16 %v176
    %v261 = vunpack.c.l.b16 %v177
    %v262 = vunpack.c.h.b16 %v177
    %v263 = vunpack.c.l.b16 %v178
    %v264 = vunpack.c.h.b16 %v178
    %v265 = vunpack.c.l.b16 %v179
    %v266 = vunpack.c.h.b16 %v179
    %v267 = vunpack.c.l.b16 %v180
    %v268 = vunpack.c.h.b16 %v180
    %v269 = vunpack.c.l.b16 %v181
    %v270 = vunpack.c.h.b16 %v181
    %v271 = vunpack.c.l.b16 %v182
    %v272 = vunpack.c.h.b16 %v182
    %v273 = vunpack.c.l.b16 %v183
    %v274 = vunpack.c.h.b16 %v183
    %v275 = vunpack.c.l.b16 %v184
    %v276 = vunpack.c.h.b16 %v184
    %v277 = vunpack.c.l.b16 %v185
    %v278 = vunpack.c.h.b16 %v185
    %v279 = vunpack.c.l.b16 %v186
    %v280 = vunpack.c.h.b16 %v186
    %v281 = vunpack.c.l.b16 %v187
    %v282 = vunpack.c.h.b16 %v187
    %v283 = vunpack.c.l.b16 %v188
    %v284 = vunpack.c.h.b16 %v188
    %v285 = vunpack.c.l.b16 %v189
    %v286 = vunpack.c.h.b16 %v189
    %v287 = vunpack.c.l.b16 %v190
    %v288 = vunpack.c.h.b16 %v190
    %v289 = vunpack.c.l.b16 %v191
    %v290 = vunpack.c.h.b16 %v191
    %v291 = vunpack.c.l.b16 %v192
    %v292 = vunpack.c.h.b16 %v192
    %v293 = vunpack.c.l.b16 %v193
    %v294 = vunpack.c.h.b16 %v193
    %v295 = vunpack.c.l.b16 %v194
    %v296 = vunpack.c.h.b16 %v194
    %v297 = vunpack.c.l.b16 %v195
    %v298 = vunpack.c.h.b16 %v195
    %v299 = vunpack.c.l.b16 %v196
    %v300 = vunpack.c.h.b16 %v196
    %v301 = vpack.c.b16 %v239, %v237
    %v302 = vpack.c.b16 %v240, %v238
    %v303 = vpack.c.b16 %v243, %v241
    %v304 = vpack.c.b16 %v244, %v242
    %v305 = vpack.c.b16 %v247, %v245
    %v306 = vpack.c.b16 %v248, %v246
    %v307 = vpack.c.b16 %v251, %v249
    %v308 = vpack.c.b16 %v252, %v250
    %v309 = vpack.c.b16 %v255, %v253
    %v310 = vpack.c.b16 %v256, %v254
    %v311 = vpack.c.b16 %v259, %v257
    %v312 = vpack.c.b16 %v260, %v258
    %v313 = vpack.c.b16 %v263, %v261
    %v314 = vpack.c.b16 %v264, %v262
    %v315 = vpack.c.b16 %v267, %v265
    %v316 = vpack.c.b16 %v268, %v266
    %v317 = vpack.c.b16 %v271, %v269
    %v318 = vpack.c.b16 %v272, %v270
    %v319 = vpack.c.b16 %v275, %v273
    %v320 = vpack.c.b16 %v276, %v274
    %v321 = vpack.c.b16 %v279, %v277
    %v322 = vpack.c.b16 %v280, %v278
    %v323 = vpack.c.b16 %v283, %v281
    %v324 = vpack.c.b16 %v284, %v282
    %v325 = vpack.c.b16 %v287, %v285
    %v326 = vpack.c.b16 %v288, %v286
    %v327 = vpack.c.b16 %v291, %v289
    %v328 = vpack.c.b16 %v292, %v290
    %v329 = vpack.c.b16 %v295, %v293
    %v330 = vpack.c.b16 %v296, %v294
    %v331 = vpack.c.b16 %v299, %v297
    %v332 = vpack.c.b16 %v300, %v298
    %365 = vmatprep.subr.bf16.mxu0 %v316
    %366 = vmatpush1.bf16.msra.mxu0 %v315
    %367 = vmatprep.subr.bf16.mxu0 %v314
    %368 = vmatpush1.bf16.msra.mxu0 %v313
    %369 = vmatprep.subr.bf16.mxu0 %v312
    %370 = vmatpush1.bf16.msra.mxu0 %v311
    %371 = vmatprep.subr.bf16.mxu0 %v310
    %372 = vmatpush1.bf16.msra.mxu0 %v309
    %373 = vmatprep.subr.bf16.mxu0 %v308
    %374 = vmatpush1.bf16.msra.mxu0 %v307
    %375 = vmatprep.subr.bf16.mxu0 %v306
    %376 = vmatpush1.bf16.msra.mxu0 %v305
    %377 = vmatprep.subr.bf16.mxu0 %v304
    %378 = vmatpush1.bf16.msra.mxu0 %v303
    %379 = vmatprep.subr.bf16.mxu0 %v302
    %380 = vmatpush1.bf16.msra.mxu0 %v301
    %381 = vmatprep.subr.bf16.mxu0 %v332
    %382 = vmatpush2.bf16.msra.mxu0 %v331
    %383 = vmatprep.subr.bf16.mxu0 %v330
    %384 = vmatpush2.bf16.msra.mxu0 %v329
    %385 = vmatprep.subr.bf16.mxu0 %v328
    %386 = vmatpush2.bf16.msra.mxu0 %v327
    %387 = vmatprep.subr.bf16.mxu0 %v326
    %388 = vmatpush2.bf16.msra.mxu0 %v325
    %389 = vmatprep.subr.bf16.mxu0 %v324
    %390 = vmatpush2.bf16.msra.mxu0 %v323
    %391 = vmatprep.subr.bf16.mxu0 %v322
    %392 = vmatpush2.bf16.msra.mxu0 %v321
    %393 = vmatprep.subr.bf16.mxu0 %v320
    %394 = vmatpush2.bf16.msra.mxu0 %v319
    %395 = vmatprep.subr.bf16.mxu0 %v318
    %396 = vmatpush2.bf16.msra.mxu0 %v317
    %397 = vmatprep.mubr.bf16.mxu0 %v164
    %398 = vmatmul.mubr.bf16.gmra.mxu0 %v163
    %v399 = vpop.f32.mrf.mxu0
    %v400 = vadd.f32 %v200, %v399
    %v401 = vpop.f32.mrf.mxu0
    %v402 = vadd.f32 %v204, %v401
    %v403 = vpop.f32.mrf.mxu0
    %v404 = vpop.f32.mrf.mxu0
    %405 = vdwg.mxu0
    %v406 = vmax.f32 %v400, 0.0
    %v407 = vmax.f32 %v402, 0.0
    %v408 = vld [vmem:[%s4] sm:$0x1]
    %v410 = vlaneseq
    %v411 = vshrl.u32 %v410, 7
    %v412 = vsub.s32 0, %v411
    %v413 = vrot.slane %v408, %v412
    %v415 = vrot.slane %v52, 4
    %v416 = vrot.slane %v53, 4
    %419 = vmatprep.subr.mxu0 0.0
    %420 = vmatpush1.xpose.msra.mxu0 0.0
    %421 = vmatprep.subr.mxu0 0.0
    %422 = vmatpush1.xpose.msra.mxu0 0.0
    %423 = vmatprep.subr.mxu0 0.0
    %424 = vmatpush1.xpose.msra.mxu0 0.0
    %425 = vmatprep.subr.mxu0 0.0
    %426 = vmatpush1.xpose.msra.mxu0 0.0
    %427 = vmatprep.subr.mxu0 0.0
    %428 = vmatpush1.xpose.msra.mxu0 0.0
    %429 = vmatprep.subr.mxu0 0.0
    %430 = vmatpush1.xpose.msra.mxu0 0.0
    %431 = vmatprep.subr.mxu0 0.0
    %432 = vmatpush1.xpose.msra.mxu0 0.0
    %433 = vmatprep.subr.mxu0 0.0
    %434 = vmatpush1.xpose.msra.mxu0 0.0
    %435 = vmatprep.subr.mxu0 0.0
    %436 = vmatpush1.xpose.msra.mxu0 0.0
    %437 = vmatprep.subr.mxu0 0.0
    %438 = vmatpush1.xpose.msra.mxu0 0.0
    %439 = vmatprep.subr.mxu0 0.0
    %440 = vmatpush1.xpose.msra.mxu0 0.0
    %441 = vmatprep.subr.mxu0 0.0
    %442 = vmatpush1.xpose.msra.mxu0 0.0
    %443 = vmatprep.subr.mxu0 0.0
    %444 = vmatpush1.xpose.msra.mxu0 0.0
    %445 = vmatprep.subr.mxu0 0.0
    %446 = vmatpush1.xpose.msra.mxu0 0.0
    %447 = vmatprep.subr.mxu0 0.0
    %448 = vmatpush1.xpose.msra.mxu0 0.0
    %449 = vmatprep.subr.mxu0 %v416
    %450 = vmatpush1.xpose.msra.mxu0 %v415
    %451 = vmatprep.subr.mxu0 0.0
    %452 = vmatpush2.xpose.msra.mxu0 0.0
    %453 = vmatprep.subr.mxu0 0.0
    %454 = vmatpush2.xpose.msra.mxu0 0.0
    %455 = vmatprep.subr.mxu0 0.0
    %456 = vmatpush2.xpose.msra.mxu0 0.0
    %457 = vmatprep.subr.mxu0 0.0
    %458 = vmatpush2.xpose.msra.mxu0 0.0
    %459 = vmatprep.subr.mxu0 0.0
    %460 = vmatpush2.xpose.msra.mxu0 0.0
    %461 = vmatprep.subr.mxu0 0.0
    %462 = vmatpush2.xpose.msra.mxu0 0.0
    %463 = vmatprep.subr.mxu0 0.0
    %464 = vmatpush2.xpose.msra.mxu0 0.0
    %465 = vmatprep.subr.mxu0 0.0
    %466 = vmatpush2.xpose.msra.mxu0 0.0
    %467 = vmatprep.subr.mxu0 0.0
    %468 = vmatpush2.xpose.msra.mxu0 0.0
    %469 = vmatprep.subr.mxu0 0.0
    %470 = vmatpush2.xpose.msra.mxu0 0.0
    %471 = vmatprep.subr.mxu0 0.0
    %472 = vmatpush2.xpose.msra.mxu0 0.0
    %473 = vmatprep.subr.mxu0 0.0
    %474 = vmatpush2.xpose.msra.mxu0 0.0
    %475 = vmatprep.subr.mxu0 0.0
    %476 = vmatpush2.xpose.msra.mxu0 0.0
    %477 = vmatprep.subr.mxu0 0.0
    %478 = vmatpush2.xpose.msra.mxu0 0.0
    %479 = vmatprep.subr.mxu0 0.0
    %480 = vmatpush2.xpose.msra.mxu0 0.0
    %481 = vmatprep.subr.mxu0 0.0
    %482 = vmatpush2.xpose.msra.mxu0 0.0
    %483 = vmatprep.mubr.f32.mxu0 %v407
    %484 = vmatmul.mubr.f32.gmra.mxu0 %v406
    %v485 = vpop.f32.mrf.mxu0
    %v486 = vadd.f32 %v413, %v485
    %v487 = vpop.f32.mrf.mxu0
    %488 = vdwg.mxu0
    %vm489 = vcmask 15360
    %490 = vst.msk [vmem:[%s5] sm:$0xff] %vm489, %v486
    // Predicated region
    $region30: #{tpu_custom_call.1} parent=1 // pred_check
      _
    $region31: #{tpu_custom_call.1} parent=1 // pred_check_branch
      %492 = sbr.rel (0) target = $region33
    $region32: #{tpu_custom_call.1} parent=1 // pred_region
      _
    $region33: #{tpu_custom_call.1} parent=1 // pred_fallthru
      _
    // Predicated region
    $region34: #{tpu_custom_call.1} parent=1 // pred_check
      _
    $region35: #{tpu_custom_call.1} parent=1 // pred_check_branch
      %494 = sbr.rel (0) target = $region37
    $region36: #{tpu_custom_call.1} parent=1 // pred_region
      _
    $region37: #{tpu_custom_call.1} parent=1 // pred_fallthru
      _
    %495 = vsyncpa [#allocation3], 1
    %496 = vsyncpa [#allocation5], 1

</llo_original>
